<compile_context>
chip_gen: v5e
topology: v5e:2x2
jax: 0.10.0
libtpu: 0.0.40
codegen_flags: <defaults>
</compile_context>

<pallas_src>
import jax
import jax.numpy as jnp
from jax.experimental import pallas as pl
from jax.experimental.pallas import tpu as pltpu

IN_FEATURES = 32
OUT_FEATURES = 64
PACK = 4                               # P-way row pack
K_PACK = IN_FEATURES * PACK            # 128 (MXU-depth, lane-dense)
N_PACK = OUT_FEATURES * PACK           # 256 (lane-dense output)

DEFAULT_TILE_M = 8192                  # rows (original) per grid step
MIN_PALLAS_ROWS = 2048                 # below this, plain XLA wins on overhead


def _linear_bias_relu_kernel(x_ref, w_ref, b_ref, o_ref):
    # (tm_p, 128) @ (128, 256) on the MXU, f32 accumulate.
    acc = jnp.dot(x_ref[...], w_ref[...], preferred_element_type=jnp.float32)
    # bias already contains `other`; relu; 256-lane unmasked stores.
    o_ref[...] = jnp.maximum(acc + b_ref[...], 0.0).astype(o_ref.dtype)


def pack_params(weight, bias, other):
    """Build (once, outside the hot path) the block-diagonal packed weight and
    the P-tiled fused bias.

    weight: (64, 32), bias: (64,), other: (64,)  ->  ((128, 256), (1, 256))
    """
    fused_bias = (bias + other).astype(jnp.float32)                   # (64,)
    wt = weight.T.astype(jnp.float32)                                 # (32, 64)
    w_packed = jnp.kron(jnp.eye(PACK, dtype=jnp.float32), wt)         # (128, 256)
    b_packed = jnp.tile(fused_bias, PACK).reshape(1, N_PACK)          # (1, 256)
    return w_packed, b_packed


def linear_add_relu(x, weight, bias, other, *, tile_m=DEFAULT_TILE_M,
                    min_pallas_rows=MIN_PALLAS_ROWS, packed_params=None):
    """relu(x @ weight.T + bias + other).

    x: (N, 32) f32; weight: (64, 32); bias: (64,); other: (64,).
    Returns (N, 64) f32.  `packed_params` (from pack_params) may be supplied to
    skip per-call packing.
    """
    n = x.shape[0]

    if n < min_pallas_rows:
        # Small-batch fast path: fused XLA matmul + add + relu, no custom call.
        return jnp.maximum(x @ weight.T + (bias + other), 0.0)

    if packed_params is None:
        packed_params = pack_params(weight, bias, other)
    w_packed, b_packed = packed_params

    # Pad N up to a multiple of PACK (zeros; relu(0 + b) rows are sliced off).
    n_pad = pl.cdiv(n, PACK) * PACK
    if n_pad != n:
        x = jnp.pad(x, ((0, n_pad - n), (0, 0)))
    np_rows = n_pad // PACK
    xp = x.reshape(np_rows, K_PACK)                      # contiguous, free

    # Packed-row tile: big (amortize per-step overhead), but keep >= 2 grid
    # steps so the second TensorCore (v7x megacore) gets work.
    tm_target = max(8, tile_m // PACK)
    half = max(8, pl.cdiv(pl.cdiv(np_rows, 2), 8) * 8)
    tm_p = max(8, min(tm_target, half))
    grid = (pl.cdiv(np_rows, tm_p),)

    cost = pl.CostEstimate(
        flops=2 * n_pad * IN_FEATURES * OUT_FEATURES,
        transcendentals=0,
        bytes_accessed=(xp.size + w_packed.size + b_packed.size
                        + np_rows * N_PACK) * 4,
    )

    out_packed = pl.pallas_call(
        _linear_bias_relu_kernel,
        out_shape=jax.ShapeDtypeStruct((np_rows, N_PACK), jnp.float32),
        grid=grid,
        in_specs=[
            pl.BlockSpec((tm_p, K_PACK), lambda i: (i, 0)),      # x tile
            pl.BlockSpec((K_PACK, N_PACK), lambda i: (0, 0)),    # W_packed (resident)
            pl.BlockSpec((1, N_PACK), lambda i: (0, 0)),         # bias (resident)
        ],
        out_specs=pl.BlockSpec((tm_p, N_PACK), lambda i: (i, 0)),
        compiler_params=pltpu.CompilerParams(
            dimension_semantics=("parallel",)),
        cost_estimate=cost,
    )(xp, w_packed, b_packed)

    out = out_packed.reshape(n_pad, OUT_FEATURES)        # contiguous, free
    if n_pad != n:
        out = out[:n]
    return out


if __name__ == "__main__":
    key = jax.random.PRNGKey(0)
    kx, kw, kb, kbig, ksmall = jax.random.split(key, 5)

    # PyTorch-style uniform init for Linear(32, 64).
    bound = 1.0 / (IN_FEATURES ** 0.5)
    weight = jax.random.uniform(
        kw, (OUT_FEATURES, IN_FEATURES), minval=-bound, maxval=bound,
        dtype=jnp.float32)
    bias = jax.random.uniform(
        kb, (OUT_FEATURES,), minval=-bound, maxval=bound, dtype=jnp.float32)

    # `other`: [0.1, 0.2, 0.3] cyclically extended to 64 features (see NOTE).
    other = jnp.resize(jnp.array([0.1, 0.2, 0.3], dtype=jnp.float32),
                       (OUT_FEATURES,))

    # Pack the weight / fused bias once (hoisted out of the hot path).
    packed = pack_params(weight, bias, other)

    def ref(x):
        return jnp.maximum(x @ weight.T + bias + other, 0.0)

    # 1) Spec-shaped input (N=1) — small-batch XLA fast path.
    x_small = jax.random.normal(kx, (1, IN_FEATURES), dtype=jnp.float32)
    out_small = linear_add_relu(x_small, weight, bias, other,
                                packed_params=packed)
    jax.block_until_ready(out_small)
    assert out_small.shape == (1, OUT_FEATURES)
    assert jnp.allclose(out_small, ref(x_small), atol=1e-5, rtol=1e-5)

    # 2) Batched input (N=4099) — Pallas kernel: exercises the row pack,
    #    N % PACK padding, >=2 parallel grid steps and a partial last block.
    x_big = jax.random.normal(kbig, (4099, IN_FEATURES), dtype=jnp.float32)
    out_big = linear_add_relu(x_big, weight, bias, other, packed_params=packed)
    jax.block_until_ready(out_big)
    assert out_big.shape == (4099, OUT_FEATURES)
    assert jnp.allclose(out_big, ref(x_big), atol=1e-5, rtol=1e-5)

    # 3) Tiny non-multiple-of-8 batch (N=20) forced through the Pallas path
    #    (overhang / masked partial block correctness check).
    x_20 = jax.random.normal(ksmall, (20, IN_FEATURES), dtype=jnp.float32)
    out_20 = linear_add_relu(x_20, weight, bias, other,
                             min_pallas_rows=1, packed_params=packed)
    jax.block_until_ready(out_20)
    assert out_20.shape == (20, OUT_FEATURES)
    assert jnp.allclose(out_20, ref(x_20), atol=1e-5, rtol=1e-5)

    print("KERNEL_OK")
</pallas_src>

<mosaic_0001>
module attributes {stable_mosaic.version = 11 : i64} {
  func.func @_linear_bias_relu_kernel(%arg0: i32, %arg1: memref<520x128xf32, #tpu.memory_space<vmem>>, %arg2: memref<128x256xf32, #tpu.memory_space<vmem>>, %arg3: memref<1x256xf32, #tpu.memory_space<vmem>>, %arg4: memref<520x256xf32, #tpu.memory_space<vmem>>) attributes {dimension_semantics = [#tpu.dimension_semantics<parallel>], iteration_bounds = array<i64: 2>, scalar_prefetch = 0 : i64, scratch_operands = 0 : i64, tpu.core_type = #tpu.core_type<tc>, window_params = [{transform_indices = @transform_0, window_bounds = array<i64: 520, 128>}, {pipeline_mode = #tpu.pipeline_mode<synchronous>, transform_indices = @transform_1, window_bounds = array<i64: 128, 256>}, {pipeline_mode = #tpu.pipeline_mode<synchronous>, transform_indices = @transform_2, window_bounds = array<i64: 1, 256>}, {transform_indices = @transform_3, window_bounds = array<i64: 520, 256>}]} {
    %c0 = arith.constant 0 : index
    %c0_0 = arith.constant 0 : index
    %0 = vector.load %arg1[%c0, %c0_0] : memref<520x128xf32, #tpu.memory_space<vmem>>, vector<520x128xf32>
    %c0_1 = arith.constant 0 : index
    %c0_2 = arith.constant 0 : index
    %1 = vector.load %arg2[%c0_1, %c0_2] : memref<128x256xf32, #tpu.memory_space<vmem>>, vector<128x256xf32>
    %cst = arith.constant dense<0.000000e+00> : vector<520x256xf32>
    %2 = tpu.matmul %0, %1, %cst {dimension_numbers = #tpu.dot_dimension_numbers<[1], [0], [0], [1], [0, 0, 1, 1], [], []>} : vector<520x128xf32>, vector<128x256xf32>, vector<520x256xf32> -> vector<520x256xf32>
    %c0_3 = arith.constant 0 : index
    %c0_4 = arith.constant 0 : index
    %3 = vector.load %arg3[%c0_3, %c0_4] : memref<1x256xf32, #tpu.memory_space<vmem>>, vector<1x256xf32>
    %4 = vector.broadcast %3 : vector<1x256xf32> to vector<520x256xf32>
    %5 = arith.addf %2, %4 : vector<520x256xf32>
    %cst_5 = arith.constant 0.000000e+00 : f32
    %6 = vector.broadcast %cst_5 : f32 to vector<520x256xf32>
    %7 = arith.maximumf %5, %6 : vector<520x256xf32>
    %c0_6 = arith.constant 0 : index
    %c0_7 = arith.constant 0 : index
    %8 = vector.load %arg4[%c0_6, %c0_7] : memref<520x256xf32, #tpu.memory_space<vmem>>, vector<520x256xf32>
    tpu.vector_store %arg4[%c0_6, %c0_7], %7 {strides = array<i32>} : memref<520x256xf32, #tpu.memory_space<vmem>>, vector<520x256xf32>,
    return
  }
  func.func @transform_0(%arg0: i32) -> (i32, i32) {
    %c0_i32 = arith.constant 0 : i32
    %c0_i32_0 = arith.constant 0 : i32
    return %arg0, %c0_i32 : i32, i32
  }
  func.func @transform_1(%arg0: i32) -> (i32, i32) {
    %c0_i32 = arith.constant 0 : i32
    %c0_i32_0 = arith.constant 0 : i32
    %c0_i32_1 = arith.constant 0 : i32
    return %c0_i32, %c0_i32_0 : i32, i32
  }
  func.func @transform_2(%arg0: i32) -> (i32, i32) {
    %c0_i32 = arith.constant 0 : i32
    %c0_i32_0 = arith.constant 0 : i32
    %c0_i32_1 = arith.constant 0 : i32
    return %c0_i32, %c0_i32_0 : i32, i32
  }
  func.func @transform_3(%arg0: i32) -> (i32, i32) {
    %c0_i32 = arith.constant 0 : i32
    %c0_i32_0 = arith.constant 0 : i32
    return %arg0, %c0_i32 : i32, i32
  }
}

</mosaic_0001>

<llo_original>
// kernel: tpu_custom_call.1
$region0: #{tpu_custom_call.1}
  #allocation0 [shape = 'u32[]', space=smem, size = 0x4, offset = 0x4, fixed_abs, tag = 'smem constant byte address 0x4 - core index']
  #allocation1 [shape = 'u32[72,128]{1,0:T(1,128)}', space=vmem, size = 0x9000, scoped, tag = 'internal scratch']
  %s0 = inlined_call_operand.hbm [shape: f32[1025,128], index: 0, kind: input, shape index: {}]
  %s1 = inlined_call_operand.hbm [shape: f32[128,256], index: 1, kind: input, shape index: {}]
  %s2 = inlined_call_operand.hbm [shape: f32[1,256], index: 2, kind: input, shape index: {}]
  %s3 = inlined_call_operand.hbm [shape: f32[1025,256], index: 3, kind: output, shape index: {}]
  %s4 = sld [smem:[#allocation0]]
  $region57: #{tpu_custom_call.1} parent=0
    _
  %s6 = ssub.s32 1, %s4
  %s7 = scalar_select 0, %s6, %s4
  $region1: #{tpu_custom_call.1} parent=0
    #allocation2 [shape = 'u8[532480]{0}', space=vmem, size = 0x82000, scoped, tag = 'input window, operand 0']
    #allocation3 [shape = 's32[2]{0}', space=sflag, size = 0x8, scoped, tag = 'scoped memory for tpu_custom_call.1']
    #allocation4 [shape = 's32[2]{0}', space=sflag, size = 0x8, scoped, tag = 'scoped memory for tpu_custom_call.1']
    #allocation5 [shape = 'u8[131072]{0}', space=vmem, size = 0x20000, scoped, tag = 'input window, operand 1, single buffered']
    #allocation6 [shape = 's32[1]{0}', space=sflag, size = 0x4, scoped, tag = 'scoped memory for tpu_custom_call.1']
    #allocation7 [shape = 'u8[1024]{0}', space=vmem, size = 0x400, scoped, tag = 'input window, operand 2, single buffered']
    #allocation8 [shape = 'u8[1064960]{0}', space=vmem, size = 0x104000, scoped, tag = 'output window, operand 0']
    %8 = vsyncpa [#allocation3], 0
    %s9 = scalar_lea.sflag [#allocation3], 1
    %10 = vsyncpa %s9, 0
    %11 = vsyncpa [#allocation6], 0
    %12 = vsyncpa [#allocation4], 0
    %s13 = scalar_lea.sflag [#allocation4], 1
    %14 = vsyncpa %s13, 0
    loop: start=0, step=1, limit=4
    $region2: #{tpu_custom_call.1} parent=1 // loop_pre_header
      _
    $region3: #{tpu_custom_call.1} parent=1 // loop_header
      %s16 = sphi 0, %s20
      %p17 = scmp.ge.s32.totalorder %s16, 4
      %s26 = sphi 0, %s28
      %s29 = sphi 0, %s26
      %s30 = sphi 0, %s29
      %s46 = sphi 0, %s30
      %s50 = sphi 0, %s50
      %s52 = sphi 0, %s50
      %s53 = sphi 0, %s52
      %s67 = sphi 0, %s53
      %s71 = sphi 0, %s71
      %s73 = sphi 0, %s71
      %s74 = sphi 0, %s73
      %s88 = sphi 0, %s74
      %s94 = sphi 0, %s96
      %s97 = sphi 0, %s94
      %s98 = sphi 0, %s97
      %s114 = sphi 0, %s98
    $region4: #{tpu_custom_call.1} parent=1 // loop_header_branch
      %19 = sbr.rel (%p17) target = $region8
    $region5: #{tpu_custom_call.1} parent=1 // loop_body
      %s21 = ssub.s32 %s16, 1
      %s22 = ssub.s32 %s16, 2
      %s23 = sadd.s32 %s16, 1
      %s24 = ssub.s32 %s16, %s23
      %p25 = scmp.eq.s32.totalorder %s24, 0
      %s27 = sadd.s32 %s26, 1
      %s28 = scalar_select %p25, %s26, %s27
      %p31 = pneg %p25
      %p32 = scmp.eq.s32.totalorder %s16, 1
      %p33 = por %p31, %p32
      %p34 = scmp.ne.s32.totalorder %s26, %s29
      %p35 = scmp.eq.s32.totalorder %s16, 0
      %p36 = por %p34, %p35
      %p37 = scmp.ne.s32.totalorder %s26, %s29
      %p38 = scmp.eq.s32.totalorder %s21, 1
      %p39 = por %p37, %p38
      %p40 = scmp.ne.s32.totalorder %s29, %s30
      %p41 = scmp.eq.s32.totalorder %s21, 0
      %p42 = por %p40, %p41
      %p43 = scmp.ne.s32.totalorder %s29, %s30
      %p44 = scmp.eq.s32.totalorder %s22, 1
      %p45 = por %p43, %p44
      %p47 = scmp.ne.s32.totalorder %s30, %s46
      %p48 = scmp.eq.s32.totalorder %s22, 0
      %p49 = por %p47, %p48
      %s51 = sadd.s32 %s50, 1
      %p54 = scmp.eq.s32.totalorder %s16, 1
      %p55 = scmp.ne.s32.totalorder %s50, %s52
      %p56 = scmp.eq.s32.totalorder %s16, 0
      %p57 = por %p55, %p56
      %p58 = scmp.ne.s32.totalorder %s50, %s52
      %p59 = scmp.eq.s32.totalorder %s21, 1
      %p60 = por %p58, %p59
      %p61 = scmp.ne.s32.totalorder %s52, %s53
      %p62 = scmp.eq.s32.totalorder %s21, 0
      %p63 = por %p61, %p62
      %p64 = scmp.ne.s32.totalorder %s52, %s53
      %p65 = scmp.eq.s32.totalorder %s22, 1
      %p66 = por %p64, %p65
      %p68 = scmp.ne.s32.totalorder %s53, %s67
      %p69 = scmp.eq.s32.totalorder %s22, 0
      %p70 = por %p68, %p69
      %s72 = sadd.s32 %s71, 1
      %p75 = scmp.eq.s32.totalorder %s16, 1
      %p76 = scmp.ne.s32.totalorder %s71, %s73
      %p77 = scmp.eq.s32.totalorder %s16, 0
      %p78 = por %p76, %p77
      %p79 = scmp.ne.s32.totalorder %s71, %s73
      %p80 = scmp.eq.s32.totalorder %s21, 1
      %p81 = por %p79, %p80
      %p82 = scmp.ne.s32.totalorder %s73, %s74
      %p83 = scmp.eq.s32.totalorder %s21, 0
      %p84 = por %p82, %p83
      %p85 = scmp.ne.s32.totalorder %s73, %s74
      %p86 = scmp.eq.s32.totalorder %s22, 1
      %p87 = por %p85, %p86
      %p89 = scmp.ne.s32.totalorder %s74, %s88
      %p90 = scmp.eq.s32.totalorder %s22, 0
      %p91 = por %p89, %p90
      %s92 = ssub.s32 %s16, %s23
      %p93 = scmp.eq.s32.totalorder %s92, 0
      %s95 = sadd.s32 %s94, 1
      %s96 = scalar_select %p93, %s94, %s95
      %p99 = pneg %p93
      %p100 = scmp.eq.s32.totalorder %s16, 1
      %p101 = por %p99, %p100
      %p102 = scmp.ne.s32.totalorder %s94, %s97
      %p103 = scmp.eq.s32.totalorder %s16, 0
      %p104 = por %p102, %p103
      %p105 = scmp.ne.s32.totalorder %s94, %s97
      %p106 = scmp.eq.s32.totalorder %s21, 1
      %p107 = por %p105, %p106
      %p108 = scmp.ne.s32.totalorder %s97, %s98
      %p109 = scmp.eq.s32.totalorder %s21, 0
      %p110 = por %p108, %p109
      %p111 = scmp.ne.s32.totalorder %s97, %s98
      %p112 = scmp.eq.s32.totalorder %s22, 1
      %p113 = por %p111, %p112
      %p115 = scmp.ne.s32.totalorder %s98, %s114
      %p116 = scmp.eq.s32.totalorder %s22, 0
      %p117 = por %p115, %p116
      %p118 = scmp.le.s32.totalorder 1, %s16
      %p119 = scmp.lt.s32.totalorder %s16, 3
      %p120 = pnand %p118, %p119
      %p121 = pneg %p120
      // Predicated region
      $region9: #{tpu_custom_call.1} parent=5 // pred_check
        _
      $region10: #{tpu_custom_call.1} parent=5 // pred_check_branch
        %123 = sbr.rel (%p120) target = $region12
      $region11: #{tpu_custom_call.1} parent=5 // pred_region
        %s124 = ssub.s32 %s16, 1
        // Predicated region
        $region13: #{tpu_custom_call.1} parent=11 // pred_check
          %p125 = pneg %p63
        $region14: #{tpu_custom_call.1} parent=11 // pred_check_branch
          %127 = sbr.rel (%p125) target = $region16
        $region15: #{tpu_custom_call.1} parent=11 // pred_region
          %129 = vsyncadd [#allocation6], 0
          %s130 = sshll.u32 %s1, 4
          %s131 = int_to_ptr.hbm [resolvable:$true] %s130
          %s132 = sshll.u32 [#allocation5], 4
          %s133 = int_to_ptr.vmem [resolvable:$true] %s132
          %138 = dma.hbm_to_vmem [thread:$0]  %s131, 4096, %s133, [#allocation6], 256, 256, 16
        $region16: #{tpu_custom_call.1} parent=11 // pred_fallthru
          _
        // Predicated region
        $region17: #{tpu_custom_call.1} parent=11 // pred_check
          %p139 = pneg %p84
        $region18: #{tpu_custom_call.1} parent=11 // pred_check_branch
          %141 = sbr.rel (%p139) target = $region20
        $region19: #{tpu_custom_call.1} parent=11 // pred_region
          %143 = vsyncadd [#allocation6], 0
          %s145 = sshll.u32 %s2, 4
          %s146 = int_to_ptr.hbm [resolvable:$true] %s145
          %s147 = sshll.u32 [#allocation7], 4
          %s148 = int_to_ptr.vmem [resolvable:$true] %s147
          %150 = dma.hbm_to_vmem [thread:$0]  %s146, 32, %s148, [#allocation6]
        $region20: #{tpu_custom_call.1} parent=11 // pred_fallthru
          _
      $region12: #{tpu_custom_call.1} parent=5 // pred_fallthru
        _
      %p151 = scmp.lt.s32.totalorder %s16, 2
      // Predicated region
      $region21: #{tpu_custom_call.1} parent=5 // pred_check
        %p152 = pneg %p151
      $region22: #{tpu_custom_call.1} parent=5 // pred_check_branch
        %154 = sbr.rel (%p152) target = $region24
      $region23: #{tpu_custom_call.1} parent=5 // pred_region
        // Predicated region
        $region25: #{tpu_custom_call.1} parent=23 // pred_check
          %p155 = pneg %p36
        $region26: #{tpu_custom_call.1} parent=23 // pred_check_branch
          %157 = sbr.rel (%p155) target = $region28
        $region27: #{tpu_custom_call.1} parent=23 // pred_region
          %s158 = sand.u32 %s26, 1
          %s159 = scalar_lea.sflag [#allocation3], %s158
          %s160 = sand.u32 %s26, 1
          %s161 = smul.addr %s160, 520
          %s162 = scalar_lea.vmem [#allocation2], %s161
          %s163 = smul.u32 65, %s16
          %s164 = ssub.s32 129, %s163
          %p165 = scmp.lt.s32.totalorder %s164, 65
          %s166 = scalar_select %p165, %s164, 65
          %s167 = smul.u32 8, %s166
          %s168 = ssub.s32 520, %s167
          %s169 = sshll.u32 %s168, 4
          %170 = vsyncadd %s159, %s169
          %p171 = scmp.ne.s32.totalorder 0, %s167
          %s172 = smul.addr %s163, 8
          %s173 = scalar_lea.hbm %s0, %s172
          %s174 = smul.u32 8, %s166
          %s175 = sshll.u32 %s173, 4
          %s176 = int_to_ptr.hbm [resolvable:$true] %s175
          %s177 = sshll.u32 %s162, 4
          %s178 = int_to_ptr.vmem [resolvable:$true] %s177
          %s179 = sshll.u32 %s174, 4
          %183 = dma.hbm_to_vmem [thread:$0]  (%p171), %s176, %s179, %s178, %s159, 128, 128, 8
        $region28: #{tpu_custom_call.1} parent=23 // pred_fallthru
          _
      $region24: #{tpu_custom_call.1} parent=5 // pred_fallthru
        _
      %p184 = scmp.le.s32.totalorder 1, %s16
      %p185 = scmp.lt.s32.totalorder %s16, 3
      %p186 = pnand %p184, %p185
      %p187 = pneg %p186
      // Predicated region
      $region29: #{tpu_custom_call.1} parent=5 // pred_check
        _
      $region30: #{tpu_custom_call.1} parent=5 // pred_check_branch
        %189 = sbr.rel (%p186) target = $region32
      $region31: #{tpu_custom_call.1} parent=5 // pred_region
        %s190 = ssub.s32 %s16, 1
        %s191 = sand.u32 %s29, 1
        %s192 = scalar_lea.sflag [#allocation3], %s191
        %s193 = sand.u32 %s29, 1
        %s194 = smul.addr %s193, 520
        %s195 = scalar_lea.vmem [#allocation2], %s194
        // Predicated region
        $region33: #{tpu_custom_call.1} parent=31 // pred_check
          %p196 = pneg %p42
        $region34: #{tpu_custom_call.1} parent=31 // pred_check_branch
          %198 = sbr.rel (%p196) target = $region36
        $region35: #{tpu_custom_call.1} parent=31 // pred_region
          %200 = dma.done %s192, 8320
        $region36: #{tpu_custom_call.1} parent=31 // pred_fallthru
          _
        // Predicated region
        $region37: #{tpu_custom_call.1} parent=31 // pred_check
          %p201 = pneg %p63
        $region38: #{tpu_custom_call.1} parent=31 // pred_check_branch
          %203 = sbr.rel (%p201) target = $region40
        $region39: #{tpu_custom_call.1} parent=31 // pred_region
          %205 = dma.done [#allocation6], 4096
        $region40: #{tpu_custom_call.1} parent=31 // pred_fallthru
          _
        // Predicated region
        $region41: #{tpu_custom_call.1} parent=31 // pred_check
          %p206 = pneg %p84
        $region42: #{tpu_custom_call.1} parent=31 // pred_check_branch
          %208 = sbr.rel (%p206) target = $region44
        $region43: #{tpu_custom_call.1} parent=31 // pred_region
          %210 = dma.done [#allocation6], 32
        $region44: #{tpu_custom_call.1} parent=31 // pred_fallthru
          _
        %s211 = sand.u32 %s29, 1
        %s212 = scalar_lea.sflag [#allocation3], %s211
        %s213 = sand.u32 %s29, 1
        %s214 = smul.addr %s213, 520
        %s215 = scalar_lea.vmem [#allocation2], %s214
        %p216 = pneg %p42
        %p217 = pneg %p39
        %p218 = pneg %p63
        %p219 = pneg %p60
        %p220 = pneg %p84
        %p221 = pneg %p81
        %p222 = pneg %p110
        %p223 = pneg %p107
        %s224 = sand.u32 %s97, 1
        %s225 = scalar_lea.sflag [#allocation4], %s224
        %s226 = sand.u32 %s97, 1
        %s227 = smul.addr %s226, 1040
        %s228 = scalar_lea.vmem [#allocation8], %s227
        %s229 = smul.u32 65, %s21
        %s230 = ssub.s32 129, %s229
        %p231 = scmp.lt.s32.totalorder %s230, 65
        %s232 = scalar_select %p231, %s230, 65
        %s233 = smul.u32 8, %s232
        %s234 = smul.u32 65, %s21
        %s235 = ssub.s32 129, %s234
        %p236 = scmp.lt.s32.totalorder %s235, 65
        %s237 = scalar_select %p236, %s235, 65
        %s238 = smul.u32 8, %s237
        %s239 = smul.u32 %s238, 2
        %v240 = vld [vmem:[%s195] sm:$0xff]
        %v241 = vld [vmem:[%s195 + $0x8] sm:$0xff]
        %v242 = vld [vmem:[%s195 + $0x10] sm:$0xff]
        %v243 = vld [vmem:[%s195 + $0x18] sm:$0xff]
        %v244 = vld [vmem:[%s195 + $0x20] sm:$0xff]
        %v245 = vld [vmem:[%s195 + $0x28] sm:$0xff]
        %v246 = vld [vmem:[%s195 + $0x30] sm:$0xff]
        %v247 = vld [vmem:[%s195 + $0x38] sm:$0xff]
        %v248 = vld [vmem:[%s195 + $0x40] sm:$0xff]
        %v249 = vld [vmem:[%s195 + $0x48] sm:$0xff]
        %v250 = vld [vmem:[%s195 + $0x50] sm:$0xff]
        %v251 = vld [vmem:[%s195 + $0x58] sm:$0xff]
        %v252 = vld [vmem:[%s195 + $0x60] sm:$0xff]
        %v253 = vld [vmem:[%s195 + $0x68] sm:$0xff]
        %v254 = vld [vmem:[%s195 + $0x70] sm:$0xff]
        %v255 = vld [vmem:[%s195 + $0x78] sm:$0xff]
        %v256 = vld [vmem:[%s195 + $0x80] sm:$0xff]
        %v257 = vld [vmem:[%s195 + $0x88] sm:$0xff]
        %v258 = vld [vmem:[%s195 + $0x90] sm:$0xff]
        %v259 = vld [vmem:[%s195 + $0x98] sm:$0xff]
        %v260 = vld [vmem:[%s195 + $0xa0] sm:$0xff]
        %v261 = vld [vmem:[%s195 + $0xa8] sm:$0xff]
        %v262 = vld [vmem:[%s195 + $0xb0] sm:$0xff]
        %v263 = vld [vmem:[%s195 + $0xb8] sm:$0xff]
        %v264 = vld [vmem:[%s195 + $0xc0] sm:$0xff]
        %v265 = vld [vmem:[%s195 + $0xc8] sm:$0xff]
        %v266 = vld [vmem:[%s195 + $0xd0] sm:$0xff]
        %v267 = vld [vmem:[%s195 + $0xd8] sm:$0xff]
        %v268 = vld [vmem:[%s195 + $0xe0] sm:$0xff]
        %v269 = vld [vmem:[%s195 + $0xe8] sm:$0xff]
        %v270 = vld [vmem:[%s195 + $0xf0] sm:$0xff]
        %v271 = vld [vmem:[%s195 + $0xf8] sm:$0xff]
        %v272 = vld [vmem:[%s195 + $0x100] sm:$0xff]
        %v273 = vld [vmem:[%s195 + $0x108] sm:$0xff]
        %v274 = vld [vmem:[%s195 + $0x110] sm:$0xff]
        %v275 = vld [vmem:[%s195 + $0x118] sm:$0xff]
        %v276 = vld [vmem:[%s195 + $0x120] sm:$0xff]
        %v277 = vld [vmem:[%s195 + $0x128] sm:$0xff]
        %v278 = vld [vmem:[%s195 + $0x130] sm:$0xff]
        %v279 = vld [vmem:[%s195 + $0x138] sm:$0xff]
        %v280 = vld [vmem:[%s195 + $0x140] sm:$0xff]
        %v281 = vld [vmem:[%s195 + $0x148] sm:$0xff]
        %v282 = vld [vmem:[%s195 + $0x150] sm:$0xff]
        %v283 = vld [vmem:[%s195 + $0x158] sm:$0xff]
        %v284 = vld [vmem:[%s195 + $0x160] sm:$0xff]
        %v285 = vld [vmem:[%s195 + $0x168] sm:$0xff]
        %v286 = vld [vmem:[%s195 + $0x170] sm:$0xff]
        %v287 = vld [vmem:[%s195 + $0x178] sm:$0xff]
        %v288 = vld [vmem:[%s195 + $0x180] sm:$0xff]
        %v289 = vld [vmem:[%s195 + $0x188] sm:$0xff]
        %v290 = vld [vmem:[%s195 + $0x190] sm:$0xff]
        %v291 = vld [vmem:[%s195 + $0x198] sm:$0xff]
        %v292 = vld [vmem:[%s195 + $0x1a0] sm:$0xff]
        %v293 = vld [vmem:[%s195 + $0x1a8] sm:$0xff]
        %v294 = vld [vmem:[%s195 + $0x1b0] sm:$0xff]
        %v295 = vld [vmem:[%s195 + $0x1b8] sm:$0xff]
        %v296 = vld [vmem:[%s195 + $0x1c0] sm:$0xff]
        %v297 = vld [vmem:[%s195 + $0x1c8] sm:$0xff]
        %v298 = vld [vmem:[%s195 + $0x1d0] sm:$0xff]
        %v299 = vld [vmem:[%s195 + $0x1d8] sm:$0xff]
        %v300 = vld [vmem:[%s195 + $0x1e0] sm:$0xff]
        %v301 = vld [vmem:[%s195 + $0x1e8] sm:$0xff]
        %v302 = vld [vmem:[%s195 + $0x1f0] sm:$0xff]
        %v303 = vld [vmem:[%s195 + $0x1f8] sm:$0xff]
        %v304 = vld [vmem:[%s195 + $0x200] sm:$0xff]
        %v305 = vld [vmem:[#allocation5] sm:$0xff]
        %v306 = vld [vmem:[#allocation5 + $0x8] sm:$0xff]
        %v307 = vld [vmem:[#allocation5 + $0x10] sm:$0xff]
        %v308 = vld [vmem:[#allocation5 + $0x18] sm:$0xff]
        %v309 = vld [vmem:[#allocation5 + $0x20] sm:$0xff]
        %v310 = vld [vmem:[#allocation5 + $0x28] sm:$0xff]
        %v311 = vld [vmem:[#allocation5 + $0x30] sm:$0xff]
        %v312 = vld [vmem:[#allocation5 + $0x38] sm:$0xff]
        %v313 = vld [vmem:[#allocation5 + $0x40] sm:$0xff]
        %v314 = vld [vmem:[#allocation5 + $0x48] sm:$0xff]
        %v315 = vld [vmem:[#allocation5 + $0x50] sm:$0xff]
        %v316 = vld [vmem:[#allocation5 + $0x58] sm:$0xff]
        %v317 = vld [vmem:[#allocation5 + $0x60] sm:$0xff]
        %v318 = vld [vmem:[#allocation5 + $0x68] sm:$0xff]
        %v319 = vld [vmem:[#allocation5 + $0x70] sm:$0xff]
        %v320 = vld [vmem:[#allocation5 + $0x78] sm:$0xff]
        %v321 = vld [vmem:[#allocation5 + $0x80] sm:$0xff]
        %v322 = vld [vmem:[#allocation5 + $0x88] sm:$0xff]
        %v323 = vld [vmem:[#allocation5 + $0x90] sm:$0xff]
        %v324 = vld [vmem:[#allocation5 + $0x98] sm:$0xff]
        %v325 = vld [vmem:[#allocation5 + $0xa0] sm:$0xff]
        %v326 = vld [vmem:[#allocation5 + $0xa8] sm:$0xff]
        %v327 = vld [vmem:[#allocation5 + $0xb0] sm:$0xff]
        %v328 = vld [vmem:[#allocation5 + $0xb8] sm:$0xff]
        %v329 = vld [vmem:[#allocation5 + $0xc0] sm:$0xff]
        %v330 = vld [vmem:[#allocation5 + $0xc8] sm:$0xff]
        %v331 = vld [vmem:[#allocation5 + $0xd0] sm:$0xff]
        %v332 = vld [vmem:[#allocation5 + $0xd8] sm:$0xff]
        %v333 = vld [vmem:[#allocation5 + $0xe0] sm:$0xff]
        %v334 = vld [vmem:[#allocation5 + $0xe8] sm:$0xff]
        %v335 = vld [vmem:[#allocation5 + $0xf0] sm:$0xff]
        %v336 = vld [vmem:[#allocation5 + $0xf8] sm:$0xff]
        %v337 = vld [vmem:[#allocation7] sm:$0x3]
        %v339 = vperm.slane %v337, 0
        %v340 = vperm.slane %v337, 1
        %343 = vmatpush.msra.mxu0 %v335
        %344 = vmatpush.msra.mxu0 %v333
        %345 = vmatpush.msra.mxu0 %v331
        %346 = vmatpush.msra.mxu0 %v329
        %347 = vmatpush.msra.mxu0 %v327
        %348 = vmatpush.msra.mxu0 %v325
        %349 = vmatpush.msra.mxu0 %v323
        %350 = vmatpush.msra.mxu0 %v321
        %351 = vmatpush.msra.mxu0 %v319
        %352 = vmatpush.msra.mxu0 %v317
        %353 = vmatpush.msra.mxu0 %v315
        %354 = vmatpush.msra.mxu0 %v313
        %355 = vmatpush.msra.mxu0 %v311
        %356 = vmatpush.msra.mxu0 %v309
        %357 = vmatpush.msra.mxu0 %v307
        %358 = vmatpush.msra.mxu0 %v305
        %359 = vmatmul.f32.gmra.mxu0 %v240
        %v360 = vpop.f32.mrf.mxu0
        %v361 = vadd.f32 %v339, %v360
        %362 = vmatmul.f32.gmra.mxu0 %v241
        %v363 = vpop.f32.mrf.mxu0
        %v364 = vadd.f32 %v339, %v363
        %365 = vmatmul.f32.gmra.mxu0 %v242
        %v366 = vpop.f32.mrf.mxu0
        %v367 = vadd.f32 %v339, %v366
        %368 = vmatmul.f32.gmra.mxu0 %v243
        %v369 = vpop.f32.mrf.mxu0
        %v370 = vadd.f32 %v339, %v369
        %371 = vmatmul.f32.gmra.mxu0 %v244
        %v372 = vpop.f32.mrf.mxu0
        %v373 = vadd.f32 %v339, %v372
        %374 = vmatmul.f32.gmra.mxu0 %v245
        %v375 = vpop.f32.mrf.mxu0
        %v376 = vadd.f32 %v339, %v375
        %377 = vmatmul.f32.gmra.mxu0 %v246
        %v378 = vpop.f32.mrf.mxu0
        %v379 = vadd.f32 %v339, %v378
        %380 = vmatmul.f32.gmra.mxu0 %v247
        %v381 = vpop.f32.mrf.mxu0
        %v382 = vadd.f32 %v339, %v381
        %383 = vmatmul.f32.gmra.mxu0 %v248
        %v384 = vpop.f32.mrf.mxu0
        %v385 = vadd.f32 %v339, %v384
        %386 = vmatmul.f32.gmra.mxu0 %v249
        %v387 = vpop.f32.mrf.mxu0
        %v388 = vadd.f32 %v339, %v387
        %389 = vmatmul.f32.gmra.mxu0 %v250
        %v390 = vpop.f32.mrf.mxu0
        %v391 = vadd.f32 %v339, %v390
        %392 = vmatmul.f32.gmra.mxu0 %v251
        %v393 = vpop.f32.mrf.mxu0
        %v394 = vadd.f32 %v339, %v393
        %395 = vmatmul.f32.gmra.mxu0 %v252
        %v396 = vpop.f32.mrf.mxu0
        %v397 = vadd.f32 %v339, %v396
        %398 = vmatmul.f32.gmra.mxu0 %v253
        %v399 = vpop.f32.mrf.mxu0
        %v400 = vadd.f32 %v339, %v399
        %401 = vmatmul.f32.gmra.mxu0 %v254
        %v402 = vpop.f32.mrf.mxu0
        %v403 = vadd.f32 %v339, %v402
        %404 = vmatmul.f32.gmra.mxu0 %v255
        %v405 = vpop.f32.mrf.mxu0
        %v406 = vadd.f32 %v339, %v405
        %407 = vmatmul.f32.gmra.mxu0 %v256
        %v408 = vpop.f32.mrf.mxu0
        %v409 = vadd.f32 %v339, %v408
        %410 = vmatmul.f32.gmra.mxu0 %v257
        %v411 = vpop.f32.mrf.mxu0
        %v412 = vadd.f32 %v339, %v411
        %413 = vmatmul.f32.gmra.mxu0 %v258
        %v414 = vpop.f32.mrf.mxu0
        %v415 = vadd.f32 %v339, %v414
        %416 = vmatmul.f32.gmra.mxu0 %v259
        %v417 = vpop.f32.mrf.mxu0
        %v418 = vadd.f32 %v339, %v417
        %419 = vmatmul.f32.gmra.mxu0 %v260
        %v420 = vpop.f32.mrf.mxu0
        %v421 = vadd.f32 %v339, %v420
        %422 = vmatmul.f32.gmra.mxu0 %v261
        %v423 = vpop.f32.mrf.mxu0
        %v424 = vadd.f32 %v339, %v423
        %425 = vmatmul.f32.gmra.mxu0 %v262
        %v426 = vpop.f32.mrf.mxu0
        %v427 = vadd.f32 %v339, %v426
        %428 = vmatmul.f32.gmra.mxu0 %v263
        %v429 = vpop.f32.mrf.mxu0
        %v430 = vadd.f32 %v339, %v429
        %431 = vmatmul.f32.gmra.mxu0 %v264
        %v432 = vpop.f32.mrf.mxu0
        %v433 = vadd.f32 %v339, %v432
        %434 = vmatmul.f32.gmra.mxu0 %v265
        %v435 = vpop.f32.mrf.mxu0
        %v436 = vadd.f32 %v339, %v435
        %437 = vmatmul.f32.gmra.mxu0 %v266
        %v438 = vpop.f32.mrf.mxu0
        %v439 = vadd.f32 %v339, %v438
        %440 = vmatmul.f32.gmra.mxu0 %v267
        %v441 = vpop.f32.mrf.mxu0
        %v442 = vadd.f32 %v339, %v441
        %443 = vmatmul.f32.gmra.mxu0 %v268
        %v444 = vpop.f32.mrf.mxu0
        %v445 = vadd.f32 %v339, %v444
        %446 = vmatmul.f32.gmra.mxu0 %v269
        %v447 = vpop.f32.mrf.mxu0
        %v448 = vadd.f32 %v339, %v447
        %449 = vmatmul.f32.gmra.mxu0 %v270
        %v450 = vpop.f32.mrf.mxu0
        %v451 = vadd.f32 %v339, %v450
        %452 = vmatmul.f32.gmra.mxu0 %v271
        %v453 = vpop.f32.mrf.mxu0
        %v454 = vadd.f32 %v339, %v453
        %455 = vmatmul.f32.gmra.mxu0 %v272
        %v456 = vpop.f32.mrf.mxu0
        %v457 = vadd.f32 %v339, %v456
        %458 = vmatmul.f32.gmra.mxu0 %v273
        %v459 = vpop.f32.mrf.mxu0
        %v460 = vadd.f32 %v339, %v459
        %461 = vmatmul.f32.gmra.mxu0 %v274
        %v462 = vpop.f32.mrf.mxu0
        %v463 = vadd.f32 %v339, %v462
        %464 = vmatmul.f32.gmra.mxu0 %v275
        %v465 = vpop.f32.mrf.mxu0
        %v466 = vadd.f32 %v339, %v465
        %467 = vmatmul.f32.gmra.mxu0 %v276
        %v468 = vpop.f32.mrf.mxu0
        %v469 = vadd.f32 %v339, %v468
        %470 = vmatmul.f32.gmra.mxu0 %v277
        %v471 = vpop.f32.mrf.mxu0
        %v472 = vadd.f32 %v339, %v471
        %473 = vmatmul.f32.gmra.mxu0 %v278
        %v474 = vpop.f32.mrf.mxu0
        %v475 = vadd.f32 %v339, %v474
        %476 = vmatmul.f32.gmra.mxu0 %v279
        %v477 = vpop.f32.mrf.mxu0
        %v478 = vadd.f32 %v339, %v477
        %479 = vmatmul.f32.gmra.mxu0 %v280
        %v480 = vpop.f32.mrf.mxu0
        %v481 = vadd.f32 %v339, %v480
        %482 = vmatmul.f32.gmra.mxu0 %v281
        %v483 = vpop.f32.mrf.mxu0
        %v484 = vadd.f32 %v339, %v483
        %485 = vmatmul.f32.gmra.mxu0 %v282
        %v486 = vpop.f32.mrf.mxu0
        %v487 = vadd.f32 %v339, %v486
        %488 = vmatmul.f32.gmra.mxu0 %v283
        %v489 = vpop.f32.mrf.mxu0
        %v490 = vadd.f32 %v339, %v489
        %491 = vmatmul.f32.gmra.mxu0 %v284
        %v492 = vpop.f32.mrf.mxu0
        %v493 = vadd.f32 %v339, %v492
        %494 = vmatmul.f32.gmra.mxu0 %v285
        %v495 = vpop.f32.mrf.mxu0
        %v496 = vadd.f32 %v339, %v495
        %497 = vmatmul.f32.gmra.mxu0 %v286
        %v498 = vpop.f32.mrf.mxu0
        %v499 = vadd.f32 %v339, %v498
        %500 = vmatmul.f32.gmra.mxu0 %v287
        %v501 = vpop.f32.mrf.mxu0
        %v502 = vadd.f32 %v339, %v501
        %503 = vmatmul.f32.gmra.mxu0 %v288
        %v504 = vpop.f32.mrf.mxu0
        %v505 = vadd.f32 %v339, %v504
        %506 = vmatmul.f32.gmra.mxu0 %v289
        %v507 = vpop.f32.mrf.mxu0
        %v508 = vadd.f32 %v339, %v507
        %509 = vmatmul.f32.gmra.mxu0 %v290
        %v510 = vpop.f32.mrf.mxu0
        %v511 = vadd.f32 %v339, %v510
        %512 = vmatmul.f32.gmra.mxu0 %v291
        %v513 = vpop.f32.mrf.mxu0
        %v514 = vadd.f32 %v339, %v513
        %515 = vmatmul.f32.gmra.mxu0 %v292
        %v516 = vpop.f32.mrf.mxu0
        %v517 = vadd.f32 %v339, %v516
        %518 = vmatmul.f32.gmra.mxu0 %v293
        %v519 = vpop.f32.mrf.mxu0
        %v520 = vadd.f32 %v339, %v519
        %521 = vmatmul.f32.gmra.mxu0 %v294
        %v522 = vpop.f32.mrf.mxu0
        %v523 = vadd.f32 %v339, %v522
        %524 = vmatmul.f32.gmra.mxu0 %v295
        %v525 = vpop.f32.mrf.mxu0
        %v526 = vadd.f32 %v339, %v525
        %527 = vmatmul.f32.gmra.mxu0 %v296
        %v528 = vpop.f32.mrf.mxu0
        %v529 = vadd.f32 %v339, %v528
        %530 = vmatmul.f32.gmra.mxu0 %v297
        %v531 = vpop.f32.mrf.mxu0
        %v532 = vadd.f32 %v339, %v531
        %533 = vmatmul.f32.gmra.mxu0 %v298
        %v534 = vpop.f32.mrf.mxu0
        %v535 = vadd.f32 %v339, %v534
        %536 = vmatmul.f32.gmra.mxu0 %v299
        %v537 = vpop.f32.mrf.mxu0
        %v538 = vadd.f32 %v339, %v537
        %539 = vmatmul.f32.gmra.mxu0 %v300
        %v540 = vpop.f32.mrf.mxu0
        %v541 = vadd.f32 %v339, %v540
        %542 = vmatmul.f32.gmra.mxu0 %v301
        %v543 = vpop.f32.mrf.mxu0
        %v544 = vadd.f32 %v339, %v543
        %545 = vmatmul.f32.gmra.mxu0 %v302
        %v546 = vpop.f32.mrf.mxu0
        %v547 = vadd.f32 %v339, %v546
        %548 = vmatmul.f32.gmra.mxu0 %v303
        %v549 = vpop.f32.mrf.mxu0
        %v550 = vadd.f32 %v339, %v549
        %551 = vmatmul.f32.gmra.mxu0 %v304
        %v552 = vpop.f32.mrf.mxu0
        %v553 = vadd.f32 %v339, %v552
        %554 = vdwg.mxu0
        %555 = vmatpush.msra.mxu0 %v336
        %556 = vmatpush.msra.mxu0 %v334
        %557 = vmatpush.msra.mxu0 %v332
        %558 = vmatpush.msra.mxu0 %v330
        %559 = vmatpush.msra.mxu0 %v328
        %560 = vmatpush.msra.mxu0 %v326
        %561 = vmatpush.msra.mxu0 %v324
        %562 = vmatpush.msra.mxu0 %v322
        %563 = vmatpush.msra.mxu0 %v320
        %564 = vmatpush.msra.mxu0 %v318
        %565 = vmatpush.msra.mxu0 %v316
        %566 = vmatpush.msra.mxu0 %v314
        %567 = vmatpush.msra.mxu0 %v312
        %568 = vmatpush.msra.mxu0 %v310
        %569 = vmatpush.msra.mxu0 %v308
        %570 = vmatpush.msra.mxu0 %v306
        %571 = vmatmul.f32.gmra.mxu0 %v240
        %v572 = vpop.f32.mrf.mxu0
        %v573 = vadd.f32 %v340, %v572
        %574 = vmatmul.f32.gmra.mxu0 %v241
        %v575 = vpop.f32.mrf.mxu0
        %v576 = vadd.f32 %v340, %v575
        %577 = vmatmul.f32.gmra.mxu0 %v242
        %v578 = vpop.f32.mrf.mxu0
        %v579 = vadd.f32 %v340, %v578
        %580 = vmatmul.f32.gmra.mxu0 %v243
        %v581 = vpop.f32.mrf.mxu0
        %v582 = vadd.f32 %v340, %v581
        %583 = vmatmul.f32.gmra.mxu0 %v244
        %v584 = vpop.f32.mrf.mxu0
        %v585 = vadd.f32 %v340, %v584
        %586 = vmatmul.f32.gmra.mxu0 %v245
        %v587 = vpop.f32.mrf.mxu0
        %v588 = vadd.f32 %v340, %v587
        %589 = vmatmul.f32.gmra.mxu0 %v246
        %v590 = vpop.f32.mrf.mxu0
        %v591 = vadd.f32 %v340, %v590
        %592 = vmatmul.f32.gmra.mxu0 %v247
        %v593 = vpop.f32.mrf.mxu0
        %v594 = vadd.f32 %v340, %v593
        %595 = vmatmul.f32.gmra.mxu0 %v248
        %v596 = vpop.f32.mrf.mxu0
        %v597 = vadd.f32 %v340, %v596
        %598 = vmatmul.f32.gmra.mxu0 %v249
        %v599 = vpop.f32.mrf.mxu0
        %v600 = vadd.f32 %v340, %v599
        %601 = vmatmul.f32.gmra.mxu0 %v250
        %v602 = vpop.f32.mrf.mxu0
        %v603 = vadd.f32 %v340, %v602
        %604 = vmatmul.f32.gmra.mxu0 %v251
        %v605 = vpop.f32.mrf.mxu0
        %v606 = vadd.f32 %v340, %v605
        %607 = vmatmul.f32.gmra.mxu0 %v252
        %v608 = vpop.f32.mrf.mxu0
        %v609 = vadd.f32 %v340, %v608
        %610 = vmatmul.f32.gmra.mxu0 %v253
        %v611 = vpop.f32.mrf.mxu0
        %v612 = vadd.f32 %v340, %v611
        %613 = vmatmul.f32.gmra.mxu0 %v254
        %v614 = vpop.f32.mrf.mxu0
        %v615 = vadd.f32 %v340, %v614
        %616 = vmatmul.f32.gmra.mxu0 %v255
        %v617 = vpop.f32.mrf.mxu0
        %v618 = vadd.f32 %v340, %v617
        %619 = vmatmul.f32.gmra.mxu0 %v256
        %v620 = vpop.f32.mrf.mxu0
        %v621 = vadd.f32 %v340, %v620
        %622 = vmatmul.f32.gmra.mxu0 %v257
        %v623 = vpop.f32.mrf.mxu0
        %v624 = vadd.f32 %v340, %v623
        %625 = vmatmul.f32.gmra.mxu0 %v258
        %v626 = vpop.f32.mrf.mxu0
        %v627 = vadd.f32 %v340, %v626
        %628 = vmatmul.f32.gmra.mxu0 %v259
        %v629 = vpop.f32.mrf.mxu0
        %v630 = vadd.f32 %v340, %v629
        %631 = vmatmul.f32.gmra.mxu0 %v260
        %v632 = vpop.f32.mrf.mxu0
        %v633 = vadd.f32 %v340, %v632
        %634 = vmatmul.f32.gmra.mxu0 %v261
        %v635 = vpop.f32.mrf.mxu0
        %v636 = vadd.f32 %v340, %v635
        %637 = vmatmul.f32.gmra.mxu0 %v262
        %v638 = vpop.f32.mrf.mxu0
        %v639 = vadd.f32 %v340, %v638
        %640 = vmatmul.f32.gmra.mxu0 %v263
        %v641 = vpop.f32.mrf.mxu0
        %v642 = vadd.f32 %v340, %v641
        %643 = vmatmul.f32.gmra.mxu0 %v264
        %v644 = vpop.f32.mrf.mxu0
        %v645 = vadd.f32 %v340, %v644
        %646 = vmatmul.f32.gmra.mxu0 %v265
        %v647 = vpop.f32.mrf.mxu0
        %v648 = vadd.f32 %v340, %v647
        %649 = vmatmul.f32.gmra.mxu0 %v266
        %v650 = vpop.f32.mrf.mxu0
        %v651 = vadd.f32 %v340, %v650
        %652 = vmatmul.f32.gmra.mxu0 %v267
        %v653 = vpop.f32.mrf.mxu0
        %v654 = vadd.f32 %v340, %v653
        %655 = vmatmul.f32.gmra.mxu0 %v268
        %v656 = vpop.f32.mrf.mxu0
        %v657 = vadd.f32 %v340, %v656
        %658 = vmatmul.f32.gmra.mxu0 %v269
        %v659 = vpop.f32.mrf.mxu0
        %v660 = vadd.f32 %v340, %v659
        %661 = vmatmul.f32.gmra.mxu0 %v270
        %v662 = vpop.f32.mrf.mxu0
        %v663 = vadd.f32 %v340, %v662
        %664 = vmatmul.f32.gmra.mxu0 %v271
        %v665 = vpop.f32.mrf.mxu0
        %v666 = vadd.f32 %v340, %v665
        %667 = vmatmul.f32.gmra.mxu0 %v272
        %v668 = vpop.f32.mrf.mxu0
        %v669 = vadd.f32 %v340, %v668
        %670 = vmatmul.f32.gmra.mxu0 %v273
        %v671 = vpop.f32.mrf.mxu0
        %v672 = vadd.f32 %v340, %v671
        %673 = vmatmul.f32.gmra.mxu0 %v274
        %v674 = vpop.f32.mrf.mxu0
        %v675 = vadd.f32 %v340, %v674
        %676 = vmatmul.f32.gmra.mxu0 %v275
        %v677 = vpop.f32.mrf.mxu0
        %v678 = vadd.f32 %v340, %v677
        %679 = vmatmul.f32.gmra.mxu0 %v276
        %v680 = vpop.f32.mrf.mxu0
        %v681 = vadd.f32 %v340, %v680
        %682 = vmatmul.f32.gmra.mxu0 %v277
        %v683 = vpop.f32.mrf.mxu0
        %v684 = vadd.f32 %v340, %v683
        %685 = vmatmul.f32.gmra.mxu0 %v278
        %v686 = vpop.f32.mrf.mxu0
        %v687 = vadd.f32 %v340, %v686
        %688 = vmatmul.f32.gmra.mxu0 %v279
        %v689 = vpop.f32.mrf.mxu0
        %v690 = vadd.f32 %v340, %v689
        %691 = vmatmul.f32.gmra.mxu0 %v280
        %v692 = vpop.f32.mrf.mxu0
        %v693 = vadd.f32 %v340, %v692
        %694 = vmatmul.f32.gmra.mxu0 %v281
        %v695 = vpop.f32.mrf.mxu0
        %v696 = vadd.f32 %v340, %v695
        %697 = vmatmul.f32.gmra.mxu0 %v282
        %v698 = vpop.f32.mrf.mxu0
        %v699 = vadd.f32 %v340, %v698
        %700 = vmatmul.f32.gmra.mxu0 %v283
        %v701 = vpop.f32.mrf.mxu0
        %v702 = vadd.f32 %v340, %v701
        %703 = vmatmul.f32.gmra.mxu0 %v284
        %v704 = vpop.f32.mrf.mxu0
        %v705 = vadd.f32 %v340, %v704
        %706 = vmatmul.f32.gmra.mxu0 %v285
        %v707 = vpop.f32.mrf.mxu0
        %v708 = vadd.f32 %v340, %v707
        %709 = vmatmul.f32.gmra.mxu0 %v286
        %v710 = vpop.f32.mrf.mxu0
        %v711 = vadd.f32 %v340, %v710
        %712 = vmatmul.f32.gmra.mxu0 %v287
        %v713 = vpop.f32.mrf.mxu0
        %v714 = vadd.f32 %v340, %v713
        %715 = vmatmul.f32.gmra.mxu0 %v288
        %v716 = vpop.f32.mrf.mxu0
        %v717 = vadd.f32 %v340, %v716
        %718 = vmatmul.f32.gmra.mxu0 %v289
        %v719 = vpop.f32.mrf.mxu0
        %v720 = vadd.f32 %v340, %v719
        %721 = vmatmul.f32.gmra.mxu0 %v290
        %v722 = vpop.f32.mrf.mxu0
        %v723 = vadd.f32 %v340, %v722
        %724 = vmatmul.f32.gmra.mxu0 %v291
        %v725 = vpop.f32.mrf.mxu0
        %v726 = vadd.f32 %v340, %v725
        %727 = vmatmul.f32.gmra.mxu0 %v292
        %v728 = vpop.f32.mrf.mxu0
        %v729 = vadd.f32 %v340, %v728
        %730 = vmatmul.f32.gmra.mxu0 %v293
        %v731 = vpop.f32.mrf.mxu0
        %v732 = vadd.f32 %v340, %v731
        %733 = vmatmul.f32.gmra.mxu0 %v294
        %v734 = vpop.f32.mrf.mxu0
        %v735 = vadd.f32 %v340, %v734
        %736 = vmatmul.f32.gmra.mxu0 %v295
        %v737 = vpop.f32.mrf.mxu0
        %v738 = vadd.f32 %v340, %v737
        %739 = vmatmul.f32.gmra.mxu0 %v296
        %v740 = vpop.f32.mrf.mxu0
        %v741 = vadd.f32 %v340, %v740
        %742 = vmatmul.f32.gmra.mxu0 %v297
        %v743 = vpop.f32.mrf.mxu0
        %v744 = vadd.f32 %v340, %v743
        %745 = vmatmul.f32.gmra.mxu0 %v298
        %v746 = vpop.f32.mrf.mxu0
        %v747 = vadd.f32 %v340, %v746
        %748 = vmatmul.f32.gmra.mxu0 %v299
        %v749 = vpop.f32.mrf.mxu0
        %v750 = vadd.f32 %v340, %v749
        %751 = vmatmul.f32.gmra.mxu0 %v300
        %v752 = vpop.f32.mrf.mxu0
        %v753 = vadd.f32 %v340, %v752
        %754 = vmatmul.f32.gmra.mxu0 %v301
        %v755 = vpop.f32.mrf.mxu0
        %v756 = vadd.f32 %v340, %v755
        %757 = vmatmul.f32.gmra.mxu0 %v302
        %v758 = vpop.f32.mrf.mxu0
        %v759 = vadd.f32 %v340, %v758
        %760 = vmatmul.f32.gmra.mxu0 %v303
        %v761 = vpop.f32.mrf.mxu0
        %v762 = vadd.f32 %v340, %v761
        %763 = vmatmul.f32.gmra.mxu0 %v304
        %v764 = vpop.f32.mrf.mxu0
        %v765 = vadd.f32 %v340, %v764
        %766 = vdwg.mxu0
        %v767 = vmax.f32 %v361, 0.0
        %v768 = vmax.f32 %v573, 0.0
        %v769 = vmax.f32 %v364, 0.0
        %v770 = vmax.f32 %v576, 0.0
        %v771 = vmax.f32 %v367, 0.0
        %v772 = vmax.f32 %v579, 0.0
        %v773 = vmax.f32 %v370, 0.0
        %v774 = vmax.f32 %v582, 0.0
        %v775 = vmax.f32 %v373, 0.0
        %v776 = vmax.f32 %v585, 0.0
        %v777 = vmax.f32 %v376, 0.0
        %v778 = vmax.f32 %v588, 0.0
        %v779 = vmax.f32 %v379, 0.0
        %v780 = vmax.f32 %v591, 0.0
        %v781 = vmax.f32 %v382, 0.0
        %v782 = vmax.f32 %v594, 0.0
        %v783 = vmax.f32 %v385, 0.0
        %v784 = vmax.f32 %v597, 0.0
        %v785 = vmax.f32 %v388, 0.0
        %v786 = vmax.f32 %v600, 0.0
        %v787 = vmax.f32 %v391, 0.0
        %v788 = vmax.f32 %v603, 0.0
        %v789 = vmax.f32 %v394, 0.0
        %v790 = vmax.f32 %v606, 0.0
        %v791 = vmax.f32 %v397, 0.0
        %v792 = vmax.f32 %v609, 0.0
        %v793 = vmax.f32 %v400, 0.0
        %v794 = vmax.f32 %v612, 0.0
        %v795 = vmax.f32 %v403, 0.0
        %v796 = vmax.f32 %v615, 0.0
        %v797 = vmax.f32 %v406, 0.0
        %v798 = vmax.f32 %v618, 0.0
        %v799 = vmax.f32 %v409, 0.0
        %v800 = vmax.f32 %v621, 0.0
        %v801 = vmax.f32 %v412, 0.0
        %v802 = vmax.f32 %v624, 0.0
        %v803 = vmax.f32 %v415, 0.0
        %v804 = vmax.f32 %v627, 0.0
        %v805 = vmax.f32 %v418, 0.0
        %v806 = vmax.f32 %v630, 0.0
        %v807 = vmax.f32 %v421, 0.0
        %v808 = vmax.f32 %v633, 0.0
        %v809 = vmax.f32 %v424, 0.0
        %v810 = vmax.f32 %v636, 0.0
        %v811 = vmax.f32 %v427, 0.0
        %v812 = vmax.f32 %v639, 0.0
        %v813 = vmax.f32 %v430, 0.0
        %v814 = vmax.f32 %v642, 0.0
        %v815 = vmax.f32 %v433, 0.0
        %v816 = vmax.f32 %v645, 0.0
        %v817 = vmax.f32 %v436, 0.0
        %v818 = vmax.f32 %v648, 0.0
        %v819 = vmax.f32 %v439, 0.0
        %v820 = vmax.f32 %v651, 0.0
        %v821 = vmax.f32 %v442, 0.0
        %v822 = vmax.f32 %v654, 0.0
        %v823 = vmax.f32 %v445, 0.0
        %v824 = vmax.f32 %v657, 0.0
        %v825 = vmax.f32 %v448, 0.0
        %v826 = vmax.f32 %v660, 0.0
        %v827 = vmax.f32 %v451, 0.0
        %v828 = vmax.f32 %v663, 0.0
        %v829 = vmax.f32 %v454, 0.0
        %v830 = vmax.f32 %v666, 0.0
        %v831 = vmax.f32 %v457, 0.0
        %v832 = vmax.f32 %v669, 0.0
        %v833 = vmax.f32 %v460, 0.0
        %v834 = vmax.f32 %v672, 0.0
        %v835 = vmax.f32 %v463, 0.0
        %v836 = vmax.f32 %v675, 0.0
        %v837 = vmax.f32 %v466, 0.0
        %v838 = vmax.f32 %v678, 0.0
        %v839 = vmax.f32 %v469, 0.0
        %v840 = vmax.f32 %v681, 0.0
        %v841 = vmax.f32 %v472, 0.0
        %v842 = vmax.f32 %v684, 0.0
        %v843 = vmax.f32 %v475, 0.0
        %v844 = vmax.f32 %v687, 0.0
        %v845 = vmax.f32 %v478, 0.0
        %v846 = vmax.f32 %v690, 0.0
        %v847 = vmax.f32 %v481, 0.0
        %v848 = vmax.f32 %v693, 0.0
        %v849 = vmax.f32 %v484, 0.0
        %v850 = vmax.f32 %v696, 0.0
        %v851 = vmax.f32 %v487, 0.0
        %v852 = vmax.f32 %v699, 0.0
        %v853 = vmax.f32 %v490, 0.0
        %v854 = vmax.f32 %v702, 0.0
        %v855 = vmax.f32 %v493, 0.0
        %v856 = vmax.f32 %v705, 0.0
        %v857 = vmax.f32 %v496, 0.0
        %v858 = vmax.f32 %v708, 0.0
        %v859 = vmax.f32 %v499, 0.0
        %v860 = vmax.f32 %v711, 0.0
        %v861 = vmax.f32 %v502, 0.0
        %v862 = vmax.f32 %v714, 0.0
        %v863 = vmax.f32 %v505, 0.0
        %v864 = vmax.f32 %v717, 0.0
        %v865 = vmax.f32 %v508, 0.0
        %v866 = vmax.f32 %v720, 0.0
        %v867 = vmax.f32 %v511, 0.0
        %v868 = vmax.f32 %v723, 0.0
        %v869 = vmax.f32 %v514, 0.0
        %v870 = vmax.f32 %v726, 0.0
        %v871 = vmax.f32 %v517, 0.0
        %v872 = vmax.f32 %v729, 0.0
        %v873 = vmax.f32 %v520, 0.0
        %v874 = vmax.f32 %v732, 0.0
        %v875 = vmax.f32 %v523, 0.0
        %v876 = vmax.f32 %v735, 0.0
        %v877 = vmax.f32 %v526, 0.0
        %v878 = vmax.f32 %v738, 0.0
        %v879 = vmax.f32 %v529, 0.0
        %v880 = vmax.f32 %v741, 0.0
        %v881 = vmax.f32 %v532, 0.0
        %v882 = vmax.f32 %v744, 0.0
        %v883 = vmax.f32 %v535, 0.0
        %v884 = vmax.f32 %v747, 0.0
        %v885 = vmax.f32 %v538, 0.0
        %v886 = vmax.f32 %v750, 0.0
        %v887 = vmax.f32 %v541, 0.0
        %v888 = vmax.f32 %v753, 0.0
        %v889 = vmax.f32 %v544, 0.0
        %v890 = vmax.f32 %v756, 0.0
        %v891 = vmax.f32 %v547, 0.0
        %v892 = vmax.f32 %v759, 0.0
        %v893 = vmax.f32 %v550, 0.0
        %v894 = vmax.f32 %v762, 0.0
        %v895 = vmax.f32 %v553, 0.0
        %v896 = vmax.f32 %v765, 0.0
        %897 = vst [vmem:[%s228] sm:$0xff] %v767
        %898 = vst [vmem:[%s228 + $0x8] sm:$0xff] %v768
        %899 = vst [vmem:[%s228 + $0x10] sm:$0xff] %v769
        %900 = vst [vmem:[%s228 + $0x18] sm:$0xff] %v770
        %901 = vst [vmem:[%s228 + $0x20] sm:$0xff] %v771
        %902 = vst [vmem:[%s228 + $0x28] sm:$0xff] %v772
        %903 = vst [vmem:[%s228 + $0x30] sm:$0xff] %v773
        %904 = vst [vmem:[%s228 + $0x38] sm:$0xff] %v774
        %905 = vst [vmem:[%s228 + $0x40] sm:$0xff] %v775
        %906 = vst [vmem:[%s228 + $0x48] sm:$0xff] %v776
        %907 = vst [vmem:[%s228 + $0x50] sm:$0xff] %v777
        %908 = vst [vmem:[%s228 + $0x58] sm:$0xff] %v778
        %909 = vst [vmem:[%s228 + $0x60] sm:$0xff] %v779
        %910 = vst [vmem:[%s228 + $0x68] sm:$0xff] %v780
        %911 = vst [vmem:[%s228 + $0x70] sm:$0xff] %v781
        %912 = vst [vmem:[%s228 + $0x78] sm:$0xff] %v782
        %913 = vst [vmem:[%s228 + $0x80] sm:$0xff] %v783
        %914 = vst [vmem:[%s228 + $0x88] sm:$0xff] %v784
        %915 = vst [vmem:[%s228 + $0x90] sm:$0xff] %v785
        %916 = vst [vmem:[%s228 + $0x98] sm:$0xff] %v786
        %917 = vst [vmem:[%s228 + $0xa0] sm:$0xff] %v787
        %918 = vst [vmem:[%s228 + $0xa8] sm:$0xff] %v788
        %919 = vst [vmem:[%s228 + $0xb0] sm:$0xff] %v789
        %920 = vst [vmem:[%s228 + $0xb8] sm:$0xff] %v790
        %921 = vst [vmem:[%s228 + $0xc0] sm:$0xff] %v791
        %922 = vst [vmem:[%s228 + $0xc8] sm:$0xff] %v792
        %923 = vst [vmem:[%s228 + $0xd0] sm:$0xff] %v793
        %924 = vst [vmem:[%s228 + $0xd8] sm:$0xff] %v794
        %925 = vst [vmem:[%s228 + $0xe0] sm:$0xff] %v795
        %926 = vst [vmem:[%s228 + $0xe8] sm:$0xff] %v796
        %927 = vst [vmem:[%s228 + $0xf0] sm:$0xff] %v797
        %928 = vst [vmem:[%s228 + $0xf8] sm:$0xff] %v798
        %929 = vst [vmem:[%s228 + $0x100] sm:$0xff] %v799
        %930 = vst [vmem:[%s228 + $0x108] sm:$0xff] %v800
        %931 = vst [vmem:[%s228 + $0x110] sm:$0xff] %v801
        %932 = vst [vmem:[%s228 + $0x118] sm:$0xff] %v802
        %933 = vst [vmem:[%s228 + $0x120] sm:$0xff] %v803
        %934 = vst [vmem:[%s228 + $0x128] sm:$0xff] %v804
        %935 = vst [vmem:[%s228 + $0x130] sm:$0xff] %v805
        %936 = vst [vmem:[%s228 + $0x138] sm:$0xff] %v806
        %937 = vst [vmem:[%s228 + $0x140] sm:$0xff] %v807
        %938 = vst [vmem:[%s228 + $0x148] sm:$0xff] %v808
        %939 = vst [vmem:[%s228 + $0x150] sm:$0xff] %v809
        %940 = vst [vmem:[%s228 + $0x158] sm:$0xff] %v810
        %941 = vst [vmem:[%s228 + $0x160] sm:$0xff] %v811
        %942 = vst [vmem:[%s228 + $0x168] sm:$0xff] %v812
        %943 = vst [vmem:[%s228 + $0x170] sm:$0xff] %v813
        %944 = vst [vmem:[%s228 + $0x178] sm:$0xff] %v814
        %945 = vst [vmem:[%s228 + $0x180] sm:$0xff] %v815
        %946 = vst [vmem:[%s228 + $0x188] sm:$0xff] %v816
        %947 = vst [vmem:[%s228 + $0x190] sm:$0xff] %v817
        %948 = vst [vmem:[%s228 + $0x198] sm:$0xff] %v818
        %949 = vst [vmem:[%s228 + $0x1a0] sm:$0xff] %v819
        %950 = vst [vmem:[%s228 + $0x1a8] sm:$0xff] %v820
        %951 = vst [vmem:[%s228 + $0x1b0] sm:$0xff] %v821
        %952 = vst [vmem:[%s228 + $0x1b8] sm:$0xff] %v822
        %953 = vst [vmem:[%s228 + $0x1c0] sm:$0xff] %v823
        %954 = vst [vmem:[%s228 + $0x1c8] sm:$0xff] %v824
        %955 = vst [vmem:[%s228 + $0x1d0] sm:$0xff] %v825
        %956 = vst [vmem:[%s228 + $0x1d8] sm:$0xff] %v826
        %957 = vst [vmem:[%s228 + $0x1e0] sm:$0xff] %v827
        %958 = vst [vmem:[%s228 + $0x1e8] sm:$0xff] %v828
        %959 = vst [vmem:[%s228 + $0x1f0] sm:$0xff] %v829
        %960 = vst [vmem:[%s228 + $0x1f8] sm:$0xff] %v830
        %961 = vst [vmem:[%s228 + $0x200] sm:$0xff] %v831
        %962 = vst [vmem:[%s228 + $0x208] sm:$0xff] %v832
        %963 = vst [vmem:[%s228 + $0x210] sm:$0xff] %v833
        %964 = vst [vmem:[%s228 + $0x218] sm:$0xff] %v834
        %965 = vst [vmem:[%s228 + $0x220] sm:$0xff] %v835
        %966 = vst [vmem:[%s228 + $0x228] sm:$0xff] %v836
        %967 = vst [vmem:[%s228 + $0x230] sm:$0xff] %v837
        %968 = vst [vmem:[%s228 + $0x238] sm:$0xff] %v838
        %969 = vst [vmem:[%s228 + $0x240] sm:$0xff] %v839
        %970 = vst [vmem:[%s228 + $0x248] sm:$0xff] %v840
        %971 = vst [vmem:[%s228 + $0x250] sm:$0xff] %v841
        %972 = vst [vmem:[%s228 + $0x258] sm:$0xff] %v842
        %973 = vst [vmem:[%s228 + $0x260] sm:$0xff] %v843
        %974 = vst [vmem:[%s228 + $0x268] sm:$0xff] %v844
        %975 = vst [vmem:[%s228 + $0x270] sm:$0xff] %v845
        %976 = vst [vmem:[%s228 + $0x278] sm:$0xff] %v846
        %977 = vst [vmem:[%s228 + $0x280] sm:$0xff] %v847
        %978 = vst [vmem:[%s228 + $0x288] sm:$0xff] %v848
        %979 = vst [vmem:[%s228 + $0x290] sm:$0xff] %v849
        %980 = vst [vmem:[%s228 + $0x298] sm:$0xff] %v850
        %981 = vst [vmem:[%s228 + $0x2a0] sm:$0xff] %v851
        %982 = vst [vmem:[%s228 + $0x2a8] sm:$0xff] %v852
        %983 = vst [vmem:[%s228 + $0x2b0] sm:$0xff] %v853
        %984 = vst [vmem:[%s228 + $0x2b8] sm:$0xff] %v854
        %985 = vst [vmem:[%s228 + $0x2c0] sm:$0xff] %v855
        %986 = vst [vmem:[%s228 + $0x2c8] sm:$0xff] %v856
        %987 = vst [vmem:[%s228 + $0x2d0] sm:$0xff] %v857
        %988 = vst [vmem:[%s228 + $0x2d8] sm:$0xff] %v858
        %989 = vst [vmem:[%s228 + $0x2e0] sm:$0xff] %v859
        %990 = vst [vmem:[%s228 + $0x2e8] sm:$0xff] %v860
        %991 = vst [vmem:[%s228 + $0x2f0] sm:$0xff] %v861
        %992 = vst [vmem:[%s228 + $0x2f8] sm:$0xff] %v862
        %993 = vst [vmem:[%s228 + $0x300] sm:$0xff] %v863
        %994 = vst [vmem:[%s228 + $0x308] sm:$0xff] %v864
        %995 = vst [vmem:[%s228 + $0x310] sm:$0xff] %v865
        %996 = vst [vmem:[%s228 + $0x318] sm:$0xff] %v866
        %997 = vst [vmem:[%s228 + $0x320] sm:$0xff] %v867
        %998 = vst [vmem:[%s228 + $0x328] sm:$0xff] %v868
        %999 = vst [vmem:[%s228 + $0x330] sm:$0xff] %v869
        %1000 = vst [vmem:[%s228 + $0x338] sm:$0xff] %v870
        %1001 = vst [vmem:[%s228 + $0x340] sm:$0xff] %v871
        %1002 = vst [vmem:[%s228 + $0x348] sm:$0xff] %v872
        %1003 = vst [vmem:[%s228 + $0x350] sm:$0xff] %v873
        %1004 = vst [vmem:[%s228 + $0x358] sm:$0xff] %v874
        %1005 = vst [vmem:[%s228 + $0x360] sm:$0xff] %v875
        %1006 = vst [vmem:[%s228 + $0x368] sm:$0xff] %v876
        %1007 = vst [vmem:[%s228 + $0x370] sm:$0xff] %v877
        %1008 = vst [vmem:[%s228 + $0x378] sm:$0xff] %v878
        %1009 = vst [vmem:[%s228 + $0x380] sm:$0xff] %v879
        %1010 = vst [vmem:[%s228 + $0x388] sm:$0xff] %v880
        %1011 = vst [vmem:[%s228 + $0x390] sm:$0xff] %v881
        %1012 = vst [vmem:[%s228 + $0x398] sm:$0xff] %v882
        %1013 = vst [vmem:[%s228 + $0x3a0] sm:$0xff] %v883
        %1014 = vst [vmem:[%s228 + $0x3a8] sm:$0xff] %v884
        %1015 = vst [vmem:[%s228 + $0x3b0] sm:$0xff] %v885
        %1016 = vst [vmem:[%s228 + $0x3b8] sm:$0xff] %v886
        %1017 = vst [vmem:[%s228 + $0x3c0] sm:$0xff] %v887
        %1018 = vst [vmem:[%s228 + $0x3c8] sm:$0xff] %v888
        %1019 = vst [vmem:[%s228 + $0x3d0] sm:$0xff] %v889
        %1020 = vst [vmem:[%s228 + $0x3d8] sm:$0xff] %v890
        %1021 = vst [vmem:[%s228 + $0x3e0] sm:$0xff] %v891
        %1022 = vst [vmem:[%s228 + $0x3e8] sm:$0xff] %v892
        %1023 = vst [vmem:[%s228 + $0x3f0] sm:$0xff] %v893
        %1024 = vst [vmem:[%s228 + $0x3f8] sm:$0xff] %v894
        %1025 = vst [vmem:[%s228 + $0x400] sm:$0xff] %v895
        %1026 = vst [vmem:[%s228 + $0x408] sm:$0xff] %v896
        %s1027 = sand.u32 %s97, 1
        %s1028 = scalar_lea.sflag [#allocation4], %s1027
        %s1029 = sand.u32 %s97, 1
        %s1030 = smul.addr %s1029, 1040
        %s1031 = scalar_lea.vmem [#allocation8], %s1030
        // Predicated region
        $region45: #{tpu_custom_call.1} parent=31 // pred_check
          %p1032 = pneg %p107
        $region46: #{tpu_custom_call.1} parent=31 // pred_check_branch
          %1034 = sbr.rel (%p1032) target = $region48
        $region47: #{tpu_custom_call.1} parent=31 // pred_region
          %s1035 = smul.u32 65, %s21
          %s1036 = ssub.s32 129, %s1035
          %p1037 = scmp.lt.s32.totalorder %s1036, 65
          %s1038 = scalar_select %p1037, %s1036, 65
          %s1039 = smul.u32 8, %s1038
          %s1040 = smul.u32 %s1039, 2
          %s1041 = ssub.s32 1040, %s1040
          %s1042 = sshll.u32 %s1041, 4
          %1043 = vsyncadd %s1028, %s1042
          %p1044 = scmp.ne.s32.totalorder 0, %s1040
          %s1045 = smul.addr %s1035, 2
          %s1046 = smul.addr %s1045, 8
          %s1047 = scalar_lea.hbm %s3, %s1046
          %s1048 = smul.u32 16, %s1038
          %s1049 = sshll.u32 %s1031, 4
          %s1050 = int_to_ptr.vmem [resolvable:$true] %s1049
          %s1051 = sshll.u32 %s1047, 4
          %s1052 = int_to_ptr.hbm [resolvable:$true] %s1051
          %s1053 = sshll.u32 %s1048, 4
          %1057 = dma.vmem_to_hbm [thread:$0]  (%p1044), %s1050, %s1053, %s1052, %s1028, 256, 256, 16
        $region48: #{tpu_custom_call.1} parent=31 // pred_fallthru
          _
      $region32: #{tpu_custom_call.1} parent=5 // pred_fallthru
        _
      %p1058 = scmp.le.s32.totalorder 2, %s16
      // Predicated region
      $region49: #{tpu_custom_call.1} parent=5 // pred_check
        %p1059 = pneg %p1058
      $region50: #{tpu_custom_call.1} parent=5 // pred_check_branch
        %1061 = sbr.rel (%p1059) target = $region52
      $region51: #{tpu_custom_call.1} parent=5 // pred_region
        %s1062 = ssub.s32 %s16, 2
        // Predicated region
        $region53: #{tpu_custom_call.1} parent=51 // pred_check
          %p1063 = pneg %p113
        $region54: #{tpu_custom_call.1} parent=51 // pred_check_branch
          %1065 = sbr.rel (%p1063) target = $region56
        $region55: #{tpu_custom_call.1} parent=51 // pred_region
          %s1066 = sand.u32 %s98, 1
          %s1067 = scalar_lea.sflag [#allocation4], %s1066
          %s1068 = sand.u32 %s98, 1
          %s1069 = smul.addr %s1068, 1040
          %s1070 = scalar_lea.vmem [#allocation8], %s1069
          %1072 = dma.done %s1067, 16640
        $region56: #{tpu_custom_call.1} parent=51 // pred_fallthru
          _
      $region52: #{tpu_custom_call.1} parent=5 // pred_fallthru
        _
    $region6: #{tpu_custom_call.1} parent=1 // loop_footer
      %s20 = sadd.s32 1, %s16
    $region7: #{tpu_custom_call.1} parent=1 // loop_footer_branch
      %15 = sbr.rel target = $region3
    $region8: #{tpu_custom_call.1} parent=1 // loop_exit
      _
    %1073 = vsyncpa [#allocation3], 1
    %s1074 = scalar_lea.sflag [#allocation3], 1
    %1075 = vsyncpa %s1074, 1
    %1076 = vsyncpa [#allocation6], 1
    %1077 = vsyncpa [#allocation4], 1
    %s1078 = scalar_lea.sflag [#allocation4], 1
    %1079 = vsyncpa %s1078, 1

</llo_original>
